<compile_context>
chip_gen: v5e
topology: v5e:2x2
jax: 0.10.0
libtpu: 0.0.40
codegen_flags: <defaults>
</compile_context>

<pallas_src>
import functools

import jax
import jax.numpy as jnp
from jax import lax
from jax.experimental import pallas as pl
from jax.experimental.pallas import tpu as pltpu


def mlp_proj_kernel(x_ref, w1_ref, b1_ref, w2_ref, b2_ref, o_ref, *, mm_dtype):
    # x streams from HBM in its original dtype; cast (if any) happens here on the VPU,
    # hidden under the matmuls, instead of an extra wrapper-side HBM pass.
    x = x_ref[...].astype(mm_dtype)                      # [tile_n, C]

    # Linear 1: weights were pre-transposed once in the wrapper to [in, out], so the
    # RHS is already the MXU-native [K, N] layout (no per-step transpose).
    h = jnp.dot(x, w1_ref[...], preferred_element_type=jnp.float32)
    h = jnp.maximum(h + b1_ref[...], 0.0)                # bias + ReLU in f32

    # Linear 2
    y = jnp.dot(h.astype(mm_dtype), w2_ref[...], preferred_element_type=jnp.float32)
    y = y + b2_ref[...]

    # F.normalize(y, dim=1, eps=1e-12): y / max(||y||, eps)
    # == y * rsqrt(max(||y||^2, eps^2)) -> EUP rsqrt, no vector divide.
    sumsq = jnp.sum(y * y, axis=-1, keepdims=True)
    inv = lax.rsqrt(jnp.maximum(sumsq, 1e-24))
    o_ref[...] = (y * inv).astype(o_ref.dtype)


def _round_up(a, m):
    return ((a + m - 1) // m) * m


def _vmem_capacity_bytes():
    try:
        return int(pltpu.get_tpu_info().vmem_capacity_bytes)
    except Exception:
        return 64 * 1024 * 1024  # v7x per-TensorCore size; safe floor everywhere


def mlp_projection_network(x, w1, b1, w2, b2, *, tile_n=None, use_bf16_matmul=False):
    """x: [N, C]; w1: [C, C]; b1: [C]; w2: [OUT, C]; b2: [OUT]  ->  [N, OUT].

    Weights are accepted in PyTorch nn.Linear layout ([out, in]); they are transposed
    once (KiB-scale) in the wrapper so the kernel contracts with a plain [K, N] RHS.
    Set use_bf16_matmul=True on v6e/v7x for bandwidth/VMEM savings (f32 accumulation
    is kept either way).
    """
    N, C = x.shape
    OUT, C2 = w2.shape
    assert C2 == C and w1.shape == (C, C) and b1.shape == (C,) and b2.shape == (OUT,)

    out_dtype = x.dtype
    mm_dtype = jnp.bfloat16 if use_bf16_matmul else x.dtype
    mm_bpe = jnp.dtype(mm_dtype).itemsize
    x_bpe = jnp.dtype(x.dtype).itemsize
    out_bpe = jnp.dtype(out_dtype).itemsize

    # Lane-dense output: pad OUT (weights/bias only) to a multiple of 128.  The padded
    # columns are exactly zero so the row L2 norm is unchanged; they are sliced off at
    # the end (no-op when OUT is already a multiple of 128).
    OUT_P = _round_up(OUT, 128)

    # One-time wrapper transpose to [in, out]: the kernel RHS is MXU-native [K, N].
    w1_t = w1.T.astype(mm_dtype)                          # [C, C]
    w2_t = w2.T.astype(mm_dtype)                          # [C, OUT]
    b1_2d = b1.astype(jnp.float32).reshape(1, C)
    b2_2d = b2.astype(jnp.float32).reshape(1, OUT)
    if OUT_P != OUT:
        w2_t = jnp.pad(w2_t, ((0, 0), (0, OUT_P - OUT)))
        b2_2d = jnp.pad(b2_2d, ((0, 0), (0, OUT_P - OUT)))

    weight_bytes = (C * C + C * OUT_P) * mm_bpe + 4 * (C + OUT_P)
    # Single-buffer the grid-invariant weights only when they are big enough for the
    # VMEM saving to matter; for KiB-scale weights leave the pipeliner defaults alone.
    single_buffer_weights = weight_bytes > (2 << 20)
    w_kwargs = dict(pipeline_mode=pl.Buffered(1)) if single_buffer_weights else {}
    n_wbuf = 1 if single_buffer_weights else 2

    vmem_cap = _vmem_capacity_bytes()

    # Batch tile: at small C this kernel is HBM-stream / grid-step-overhead bound, so
    # take the biggest tile that fits a VMEM budget (cap 1024 rows).  Whole batch in a
    # single step when it fits; batches >512 rows split into two tiles so both v7x
    # TensorCores get work (no-op on single-TC v5e/v6e).
    per_row = 2 * C * x_bpe + 2 * OUT_P * out_bpe + (C + OUT_P) * (4 + mm_bpe)
    if tile_n is None:
        budget = max(int(0.5 * vmem_cap) - 2 * weight_bytes, per_row * 64)
        cap = min(1024, max(64, (budget // per_row) // 8 * 8))
        if N <= cap:
            tile_n = N if N <= 512 else _round_up((N + 1) // 2, 8)
        else:
            tile_n = cap
    else:
        tile_n = max(1, min(int(tile_n), N))
        if tile_n < N:
            tile_n = min(_round_up(tile_n, 8), N)   # multiple of 8, or == full batch

    # Ragged tail: no jnp.pad of x and no out[:N] slice — Pallas masks the partial
    # last block (rows are independent, so pad-row garbage never touches real rows).
    grid = (pl.cdiv(N, tile_n),)

    # VMEM budget: double-buffered x/out tiles + f32 intermediates (+ bf16 casts) +
    # resident weights; 2x headroom, floor 16 MiB, cap at 75% of this chip's VMEM.
    est = (2 * tile_n * C * x_bpe
           + 2 * tile_n * OUT_P * out_bpe
           + tile_n * (C + OUT_P) * 4
           + tile_n * (C + OUT_P) * mm_bpe
           + n_wbuf * weight_bytes)
    vmem_limit = int(min(max(2 * est, 16 * 1024 * 1024), (3 * vmem_cap) // 4))

    kernel = functools.partial(mlp_proj_kernel, mm_dtype=mm_dtype)

    out = pl.pallas_call(
        kernel,
        out_shape=jax.ShapeDtypeStruct((N, OUT_P), out_dtype),
        grid_spec=pltpu.PrefetchScalarGridSpec(
            num_scalar_prefetch=0,
            grid=grid,
            in_specs=[
                pl.BlockSpec((tile_n, C), lambda i: (i, 0)),              # x tile (streamed)
                pl.BlockSpec((C, C), lambda i: (0, 0), **w_kwargs),       # W1^T (resident)
                pl.BlockSpec((1, C), lambda i: (0, 0), **w_kwargs),       # b1
                pl.BlockSpec((C, OUT_P), lambda i: (0, 0), **w_kwargs),   # W2^T (resident)
                pl.BlockSpec((1, OUT_P), lambda i: (0, 0), **w_kwargs),   # b2
            ],
            out_specs=pl.BlockSpec((tile_n, OUT_P), lambda i: (i, 0)),
        ),
        compiler_params=pltpu.CompilerParams(
            dimension_semantics=("parallel",),
            vmem_limit_bytes=vmem_limit,
        ),
    )(x, w1_t, b1_2d, w2_t, b2_2d)

    return out if OUT_P == OUT else out[:, :OUT]


def reference(x, w1, b1, w2, b2):
    h = jnp.maximum(x @ w1.T + b1, 0.0)
    y = h @ w2.T + b2
    n = jnp.sqrt(jnp.sum(y * y, axis=1, keepdims=True))
    return y / jnp.maximum(n, 1e-12)


if __name__ == "__main__":
    # Small shapes consistent with the module: batch=16, in_channels=32, output_dim=128
    N, C, OUT = 16, 32, 128
    key = jax.random.PRNGKey(0)
    kx, k1, k2, k3, k4 = jax.random.split(key, 5)

    x = jax.random.normal(kx, (N, C), dtype=jnp.float32)
    # PyTorch Linear parameter shapes: W [out, in], b [out].
    bound1 = 1.0 / (C ** 0.5)
    w1 = jax.random.uniform(k1, (C, C), jnp.float32, -bound1, bound1)
    b1 = jax.random.uniform(k2, (C,), jnp.float32, -bound1, bound1)
    w2 = jax.random.uniform(k3, (OUT, C), jnp.float32, -bound1, bound1)
    b2 = jax.random.uniform(k4, (OUT,), jnp.float32, -bound1, bound1)

    ref = reference(x, w1, b1, w2, b2)

    # 1) f32 path (bit-close to the PyTorch math).
    out = jax.block_until_ready(mlp_projection_network(x, w1, b1, w2, b2))
    assert out.shape == (N, OUT)
    assert jnp.allclose(out, ref, atol=1e-5, rtol=1e-5), "f32 mismatch vs reference"

    # 2) Ragged batch + explicit small tile: exercises the no-pad masked-tail path.
    n_r = 13
    out_r = jax.block_until_ready(
        mlp_projection_network(x[:n_r], w1, b1, w2, b2, tile_n=8))
    assert out_r.shape == (n_r, OUT)
    assert jnp.allclose(out_r, ref[:n_r], atol=1e-5, rtol=1e-5), "ragged-tile mismatch"

    # 3) bf16 MXU path (recommended on v6e/v7x); looser tolerance by construction.
    out_bf = jax.block_until_ready(
        mlp_projection_network(x, w1, b1, w2, b2, use_bf16_matmul=True))
    assert out_bf.shape == (N, OUT)
    assert jnp.allclose(out_bf, ref, atol=2e-2, rtol=0.0), "bf16 mismatch vs reference"

    print("KERNEL_OK")
</pallas_src>

<mosaic_0001>
module attributes {stable_mosaic.version = 11 : i64} {
  func.func @mlp_proj_kernel(%arg0: i32, %arg1: memref<16x32xf32, #tpu.memory_space<vmem>>, %arg2: memref<32x32xf32, #tpu.memory_space<vmem>>, %arg3: memref<1x32xf32, #tpu.memory_space<vmem>>, %arg4: memref<32x128xf32, #tpu.memory_space<vmem>>, %arg5: memref<1x128xf32, #tpu.memory_space<vmem>>, %arg6: memref<16x128xf32, #tpu.memory_space<vmem>>) attributes {dimension_semantics = [#tpu.dimension_semantics<parallel>], iteration_bounds = array<i64: 1>, scalar_prefetch = 0 : i64, scratch_operands = 0 : i64, tpu.core_type = #tpu.core_type<tc>, window_params = [{transform_indices = @transform_0, window_bounds = array<i64: 16, 32>}, {pipeline_mode = #tpu.pipeline_mode<synchronous>, transform_indices = @transform_1, window_bounds = array<i64: 32, 32>}, {pipeline_mode = #tpu.pipeline_mode<synchronous>, transform_indices = @transform_2, window_bounds = array<i64: 1, 32>}, {pipeline_mode = #tpu.pipeline_mode<synchronous>, transform_indices = @transform_3, window_bounds = array<i64: 32, 128>}, {pipeline_mode = #tpu.pipeline_mode<synchronous>, transform_indices = @transform_4, window_bounds = array<i64: 1, 128>}, {transform_indices = @transform_5, window_bounds = array<i64: 16, 128>}]} {
    %c0 = arith.constant 0 : index
    %c0_0 = arith.constant 0 : index
    %0 = vector.load %arg1[%c0, %c0_0] : memref<16x32xf32, #tpu.memory_space<vmem>>, vector<16x32xf32>
    %c0_1 = arith.constant 0 : index
    %c0_2 = arith.constant 0 : index
    %1 = vector.load %arg2[%c0_1, %c0_2] : memref<32x32xf32, #tpu.memory_space<vmem>>, vector<32x32xf32>
    %cst = arith.constant dense<0.000000e+00> : vector<16x32xf32>
    %2 = tpu.matmul %0, %1, %cst {dimension_numbers = #tpu.dot_dimension_numbers<[1], [0], [0], [1], [0, 0, 1, 1], [], []>} : vector<16x32xf32>, vector<32x32xf32>, vector<16x32xf32> -> vector<16x32xf32>
    %c0_3 = arith.constant 0 : index
    %c0_4 = arith.constant 0 : index
    %3 = vector.load %arg3[%c0_3, %c0_4] : memref<1x32xf32, #tpu.memory_space<vmem>>, vector<1x32xf32>
    %4 = vector.broadcast %3 : vector<1x32xf32> to vector<16x32xf32>
    %5 = arith.addf %2, %4 : vector<16x32xf32>
    %cst_5 = arith.constant 0.000000e+00 : f32
    %6 = vector.broadcast %cst_5 : f32 to vector<16x32xf32>
    %7 = arith.maximumf %5, %6 : vector<16x32xf32>
    %c0_6 = arith.constant 0 : index
    %c0_7 = arith.constant 0 : index
    %8 = vector.load %arg4[%c0_6, %c0_7] : memref<32x128xf32, #tpu.memory_space<vmem>>, vector<32x128xf32>
    %cst_8 = arith.constant dense<0.000000e+00> : vector<16x128xf32>
    %9 = tpu.matmul %7, %8, %cst_8 {dimension_numbers = #tpu.dot_dimension_numbers<[1], [0], [0], [1], [0, 0, 1, 1], [], []>} : vector<16x32xf32>, vector<32x128xf32>, vector<16x128xf32> -> vector<16x128xf32>
    %c0_9 = arith.constant 0 : index
    %c0_10 = arith.constant 0 : index
    %10 = vector.load %arg5[%c0_9, %c0_10] : memref<1x128xf32, #tpu.memory_space<vmem>>, vector<1x128xf32>
    %11 = vector.broadcast %10 : vector<1x128xf32> to vector<16x128xf32>
    %12 = arith.addf %9, %11 : vector<16x128xf32>
    %13 = arith.mulf %12, %12 : vector<16x128xf32>
    %cst_11 = arith.constant dense<0.000000e+00> : vector<16xf32>
    %14 = vector.multi_reduction <add>, %13, %cst_11 [1] : vector<16x128xf32> to vector<16xf32>
    %15 = vector.shape_cast %14 : vector<16xf32> to vector<16x1xf32>
    %cst_12 = arith.constant 1.000000e-24 : f32
    %16 = vector.broadcast %cst_12 : f32 to vector<16x1xf32>
    %17 = arith.maximumf %15, %16 : vector<16x1xf32>
    %18 = math.rsqrt %17 : vector<16x1xf32>
    %19 = vector.broadcast %18 : vector<16x1xf32> to vector<16x128xf32>
    %20 = arith.mulf %12, %19 : vector<16x128xf32>
    %c0_13 = arith.constant 0 : index
    %c0_14 = arith.constant 0 : index
    %21 = vector.load %arg6[%c0_13, %c0_14] : memref<16x128xf32, #tpu.memory_space<vmem>>, vector<16x128xf32>
    tpu.vector_store %arg6[%c0_13, %c0_14], %20 {strides = array<i32>} : memref<16x128xf32, #tpu.memory_space<vmem>>, vector<16x128xf32>,
    return
  }
  func.func @transform_0(%arg0: i32) -> (i32, i32) {
    %c0_i32 = arith.constant 0 : i32
    %c0_i32_0 = arith.constant 0 : i32
    return %arg0, %c0_i32 : i32, i32
  }
  func.func @transform_1(%arg0: i32) -> (i32, i32) {
    %c0_i32 = arith.constant 0 : i32
    %c0_i32_0 = arith.constant 0 : i32
    %c0_i32_1 = arith.constant 0 : i32
    return %c0_i32, %c0_i32_0 : i32, i32
  }
  func.func @transform_2(%arg0: i32) -> (i32, i32) {
    %c0_i32 = arith.constant 0 : i32
    %c0_i32_0 = arith.constant 0 : i32
    %c0_i32_1 = arith.constant 0 : i32
    return %c0_i32, %c0_i32_0 : i32, i32
  }
  func.func @transform_3(%arg0: i32) -> (i32, i32) {
    %c0_i32 = arith.constant 0 : i32
    %c0_i32_0 = arith.constant 0 : i32
    %c0_i32_1 = arith.constant 0 : i32
    return %c0_i32, %c0_i32_0 : i32, i32
  }
  func.func @transform_4(%arg0: i32) -> (i32, i32) {
    %c0_i32 = arith.constant 0 : i32
    %c0_i32_0 = arith.constant 0 : i32
    %c0_i32_1 = arith.constant 0 : i32
    return %c0_i32, %c0_i32_0 : i32, i32
  }
  func.func @transform_5(%arg0: i32) -> (i32, i32) {
    %c0_i32 = arith.constant 0 : i32
    %c0_i32_0 = arith.constant 0 : i32
    return %arg0, %c0_i32 : i32, i32
  }
}

</mosaic_0001>

<llo_original>
// kernel: tpu_custom_call.1
$region0: #{tpu_custom_call.1}
  #allocation0 [shape = 'u32[]', space=smem, size = 0x4, offset = 0x4, fixed_abs, tag = 'smem constant byte address 0x4 - core index']
  #allocation1 [shape = 'u32[72,128]{1,0:T(1,128)}', space=vmem, size = 0x9000, scoped, tag = 'internal scratch']
  %s0 = inlined_call_operand.hbm [shape: f32[16,32], index: 0, kind: input, shape index: {}]
  %s1 = inlined_call_operand.hbm [shape: f32[32,32], index: 1, kind: input, shape index: {}]
  %s2 = inlined_call_operand.vmem [shape: f32[1,32], index: 2, kind: input, shape index: {}]
  %s3 = inlined_call_operand.hbm [shape: f32[32,128], index: 3, kind: input, shape index: {}]
  %s4 = inlined_call_operand.vmem [shape: f32[1,128], index: 4, kind: input, shape index: {}]
  %s5 = inlined_call_operand.hbm [shape: f32[16,128], index: 5, kind: output, shape index: {}]
  %s6 = sld [smem:[#allocation0]]
  $region42: #{tpu_custom_call.1} parent=0
    _
  %s8 = ssub.s32 1, %s6
  %s9 = scalar_select 0, %s8, %s6
  $region1: #{tpu_custom_call.1} parent=0
    #allocation2 [shape = 'u8[8192]{0}', space=vmem, size = 0x2000, scoped, tag = 'input window, operand 0, single buffered']
    #allocation3 [shape = 's32[1]{0}', space=sflag, size = 0x4, scoped, tag = 'scoped memory for tpu_custom_call.1']
    #allocation4 [shape = 's32[1]{0}', space=sflag, size = 0x4, scoped, tag = 'scoped memory for tpu_custom_call.1']
    #allocation5 [shape = 'u8[16384]{0}', space=vmem, size = 0x4000, scoped, tag = 'input window, operand 1, single buffered']
    #allocation6 [shape = 's32[1]{0}', space=sflag, size = 0x4, scoped, tag = 'scoped memory for tpu_custom_call.1']
    #allocation7 [shape = 'u8[16384]{0}', space=vmem, size = 0x4000, scoped, tag = 'input window, operand 3, single buffered']
    #allocation8 [shape = 'u8[8192]{0}', space=vmem, size = 0x2000, scoped, tag = 'output window, operand 0, single buffered']
    %10 = vsyncpa [#allocation3], 0
    %11 = vsyncpa [#allocation6], 0
    %12 = vsyncpa [#allocation4], 0
    // Predicated region
    $region2: #{tpu_custom_call.1} parent=1 // pred_check
      _
    $region3: #{tpu_custom_call.1} parent=1 // pred_check_branch
      %14 = sbr.rel (0) target = $region5
    $region4: #{tpu_custom_call.1} parent=1 // pred_region
      %16 = vsyncadd [#allocation3], 0
      %s17 = sshll.u32 %s0, 4
      %s18 = int_to_ptr.hbm [resolvable:$true] %s17
      %s19 = sshll.u32 [#allocation2], 4
      %s20 = int_to_ptr.vmem [resolvable:$true] %s19
      %25 = dma.hbm_to_vmem [thread:$0]  %s18, 256, %s20, [#allocation3], 128, 128, 8
    $region5: #{tpu_custom_call.1} parent=1 // pred_fallthru
      _
    // Predicated region
    $region6: #{tpu_custom_call.1} parent=1 // pred_check
      _
    $region7: #{tpu_custom_call.1} parent=1 // pred_check_branch
      %27 = sbr.rel (0) target = $region9
    $region8: #{tpu_custom_call.1} parent=1 // pred_region
      %29 = vsyncadd [#allocation6], 0
      %s30 = sshll.u32 %s1, 4
      %s31 = int_to_ptr.hbm [resolvable:$true] %s30
      %s32 = sshll.u32 [#allocation5], 4
      %s33 = int_to_ptr.vmem [resolvable:$true] %s32
      %38 = dma.hbm_to_vmem [thread:$0]  %s31, 512, %s33, [#allocation6], 128, 128, 8
    $region9: #{tpu_custom_call.1} parent=1 // pred_fallthru
      _
    // Predicated region
    $region10: #{tpu_custom_call.1} parent=1 // pred_check
      _
    $region11: #{tpu_custom_call.1} parent=1 // pred_check_branch
      %40 = sbr.rel (0) target = $region13
    $region12: #{tpu_custom_call.1} parent=1 // pred_region
      _
    $region13: #{tpu_custom_call.1} parent=1 // pred_fallthru
      _
    // Predicated region
    $region14: #{tpu_custom_call.1} parent=1 // pred_check
      _
    $region15: #{tpu_custom_call.1} parent=1 // pred_check_branch
      %42 = sbr.rel (0) target = $region17
    $region16: #{tpu_custom_call.1} parent=1 // pred_region
      %44 = vsyncadd [#allocation6], 0
      %s45 = sshll.u32 %s3, 4
      %s46 = int_to_ptr.hbm [resolvable:$true] %s45
      %s47 = sshll.u32 [#allocation7], 4
      %s48 = int_to_ptr.vmem [resolvable:$true] %s47
      %53 = dma.hbm_to_vmem [thread:$0]  %s46, 512, %s48, [#allocation6], 128, 128, 8
    $region17: #{tpu_custom_call.1} parent=1 // pred_fallthru
      _
    // Predicated region
    $region18: #{tpu_custom_call.1} parent=1 // pred_check
      _
    $region19: #{tpu_custom_call.1} parent=1 // pred_check_branch
      %55 = sbr.rel (0) target = $region21
    $region20: #{tpu_custom_call.1} parent=1 // pred_region
      _
    $region21: #{tpu_custom_call.1} parent=1 // pred_fallthru
      _
    // Predicated region
    $region22: #{tpu_custom_call.1} parent=1 // pred_check
      _
    $region23: #{tpu_custom_call.1} parent=1 // pred_check_branch
      %57 = sbr.rel (0) target = $region25
    $region24: #{tpu_custom_call.1} parent=1 // pred_region
      %59 = dma.done [#allocation3], 256
    $region25: #{tpu_custom_call.1} parent=1 // pred_fallthru
      _
    // Predicated region
    $region26: #{tpu_custom_call.1} parent=1 // pred_check
      _
    $region27: #{tpu_custom_call.1} parent=1 // pred_check_branch
      %61 = sbr.rel (0) target = $region29
    $region28: #{tpu_custom_call.1} parent=1 // pred_region
      %63 = dma.done [#allocation6], 512
    $region29: #{tpu_custom_call.1} parent=1 // pred_fallthru
      _
    // Predicated region
    $region30: #{tpu_custom_call.1} parent=1 // pred_check
      _
    $region31: #{tpu_custom_call.1} parent=1 // pred_check_branch
      %65 = sbr.rel (0) target = $region33
    $region32: #{tpu_custom_call.1} parent=1 // pred_region
      %67 = dma.done [#allocation6], 512
    $region33: #{tpu_custom_call.1} parent=1 // pred_fallthru
      _
    %v68 = vld [vmem:[#allocation2] sm:$0xff]
    %v69 = vld [vmem:[#allocation2 + $0x8] sm:$0xff]
    %v70 = vld [vmem:[#allocation5] sm:$0xff]
    %v71 = vld [vmem:[#allocation5 + $0x8] sm:$0xff]
    %v72 = vld [vmem:[#allocation5 + $0x10] sm:$0xff]
    %v73 = vld [vmem:[#allocation5 + $0x18] sm:$0xff]
    %v74 = vld [vmem:[%s2] sm:$0x1]
    %v76 = vperm.slane %v74, 0
    %vm78 = vcmask 261120
    %v80 = vsel %vm78, %v68, 0
    %v83 = vsel %vm78, %v69, 0
    %85 = vmatpush.msra.mxu0 0.0
    %86 = vmatpush.msra.mxu0 0.0
    %87 = vmatpush.msra.mxu0 0.0
    %88 = vmatpush.msra.mxu0 0.0
    %89 = vmatpush.msra.mxu0 0.0
    %90 = vmatpush.msra.mxu0 0.0
    %91 = vmatpush.msra.mxu0 0.0
    %92 = vmatpush.msra.mxu0 0.0
    %93 = vmatpush.msra.mxu0 0.0
    %94 = vmatpush.msra.mxu0 0.0
    %95 = vmatpush.msra.mxu0 0.0
    %96 = vmatpush.msra.mxu0 0.0
    %97 = vmatpush.msra.mxu0 %v73
    %98 = vmatpush.msra.mxu0 %v72
    %99 = vmatpush.msra.mxu0 %v71
    %100 = vmatpush.msra.mxu0 %v70
    %101 = vmatmul.f32.gmra.mxu0 %v80
    %v102 = vpop.f32.mrf.mxu0
    %v103 = vadd.f32 %v76, %v102
    %104 = vmatmul.f32.gmra.mxu0 %v83
    %v105 = vpop.f32.mrf.mxu0
    %v106 = vadd.f32 %v76, %v105
    %107 = vdwg.mxu0
    %v108 = vmax.f32 %v103, 0.0
    %v109 = vmax.f32 %v106, 0.0
    %v110 = vld [vmem:[#allocation7] sm:$0xff]
    %v111 = vld [vmem:[#allocation7 + $0x8] sm:$0xff]
    %v112 = vld [vmem:[#allocation7 + $0x10] sm:$0xff]
    %v113 = vld [vmem:[#allocation7 + $0x18] sm:$0xff]
    %v114 = vld [vmem:[%s4] sm:$0x1]
    %v116 = vperm.slane %v114, 0
    %v119 = vsel %vm78, %v108, 0
    %v122 = vsel %vm78, %v109, 0
    %124 = vmatpush.msra.mxu0 0.0
    %125 = vmatpush.msra.mxu0 0.0
    %126 = vmatpush.msra.mxu0 0.0
    %127 = vmatpush.msra.mxu0 0.0
    %128 = vmatpush.msra.mxu0 0.0
    %129 = vmatpush.msra.mxu0 0.0
    %130 = vmatpush.msra.mxu0 0.0
    %131 = vmatpush.msra.mxu0 0.0
    %132 = vmatpush.msra.mxu0 0.0
    %133 = vmatpush.msra.mxu0 0.0
    %134 = vmatpush.msra.mxu0 0.0
    %135 = vmatpush.msra.mxu0 0.0
    %136 = vmatpush.msra.mxu0 %v113
    %137 = vmatpush.msra.mxu0 %v112
    %138 = vmatpush.msra.mxu0 %v111
    %139 = vmatpush.msra.mxu0 %v110
    %140 = vmatmul.f32.gmra.mxu0 %v119
    %v141 = vpop.f32.mrf.mxu0
    %v142 = vadd.f32 %v116, %v141
    %143 = vmatmul.f32.gmra.mxu0 %v122
    %v144 = vpop.f32.mrf.mxu0
    %v145 = vadd.f32 %v116, %v144
    %146 = vdwg.mxu0
    %v147 = vmul.f32 %v142, %v142
    %v148 = vmul.f32 %v145, %v145
    %149 = vadd.xlane.f32.xlu0 %v147
    %v150 = vpop.xlane.xlu0 %149
    %151 = vadd.xlane.f32.xlu0 %v148
    %v152 = vpop.xlane.xlu0 %151
    %v153 = vmax.f32 %v150, 1e-24
    %v154 = vmax.f32 %v152, 1e-24
    %v155 = vrsqrt.pop %v153
    %v156 = vmul.f32 %v155, %v153
    %v157 = vmul.f32 %v156, %v155
    %v158 = vmul.f32 0.5, %v157
    %v159 = vsub.f32 1.5, %v158
    %v160 = vmul.f32 %v155, %v159
    %vm161 = vweird.f32 %v153
    %vm162 = vweird.f32 %v155
    %vm163 = vmor %vm161, %vm162
    %v164 = vsel %vm163, %v155, %v160
    %v165 = vrsqrt.pop %v154
    %v166 = vmul.f32 %v165, %v154
    %v167 = vmul.f32 %v166, %v165
    %v168 = vmul.f32 0.5, %v167
    %v169 = vsub.f32 1.5, %v168
    %v170 = vmul.f32 %v165, %v169
    %vm171 = vweird.f32 %v154
    %vm172 = vweird.f32 %v165
    %vm173 = vmor %vm171, %vm172
    %v174 = vsel %vm173, %v165, %v170
    %v175 = vmul.f32 %v142, %v164
    %v176 = vmul.f32 %v145, %v174
    %177 = vst [vmem:[#allocation8] sm:$0xff] %v175
    %178 = vst [vmem:[#allocation8 + $0x8] sm:$0xff] %v176
    // Predicated region
    $region34: #{tpu_custom_call.1} parent=1 // pred_check
      _
    $region35: #{tpu_custom_call.1} parent=1 // pred_check_branch
      %180 = sbr.rel (0) target = $region37
    $region36: #{tpu_custom_call.1} parent=1 // pred_region
      %182 = vsyncadd [#allocation4], 0
      %s183 = sshll.u32 [#allocation8], 4
      %s184 = int_to_ptr.vmem [resolvable:$true] %s183
      %s185 = sshll.u32 %s5, 4
      %s186 = int_to_ptr.hbm [resolvable:$true] %s185
      %191 = dma.vmem_to_hbm [thread:$0]  %s184, 256, %s186, [#allocation4], 128, 128, 8
    $region37: #{tpu_custom_call.1} parent=1 // pred_fallthru
      _
    // Predicated region
    $region38: #{tpu_custom_call.1} parent=1 // pred_check
      _
    $region39: #{tpu_custom_call.1} parent=1 // pred_check_branch
      %193 = sbr.rel (0) target = $region41
    $region40: #{tpu_custom_call.1} parent=1 // pred_region
      %195 = dma.done [#allocation4], 256
    $region41: #{tpu_custom_call.1} parent=1 // pred_fallthru
      _
    %196 = vsyncpa [#allocation3], 1
    %197 = vsyncpa [#allocation6], 1
    %198 = vsyncpa [#allocation4], 1

</llo_original>
